<compile_context>
chip_gen: v6e
topology: v6e:2x2x1
jax: 0.10.0
libtpu: 0.0.40
codegen_flags: <defaults>
</compile_context>

<pallas_src>
import jax
import jax.numpy as jnp
from jax.experimental import pallas as pl
from jax.experimental.pallas import tpu as pltpu


def _round_up(x, m):
    return (x + m - 1) // m * m


def formula_attn_kernel(enc_ref, frm_ref, w1_ref, b1_ref, w2t_ref, b2_ref,
                        ws_ref, bs_ref, mask_ref, out_ref, e1t_ref):
    """One (batch-row, R-tile) grid step.

    enc_ref:  (1, H, Lp)   encoder outputs for this batch row, hidden-major
                           (H on sublanes, padded seq-len Lp on lanes)
    frm_ref:  (TR, I)      formula-score tile
    w1_ref:   (H, H)       attn1 weight (out, in) — left-multiplies enc^T
    b1_ref:   (H, 1)       attn1 bias as a column
    w2t_ref:  (I, H)       attn2 weight, pre-transposed to (in, out)
    b2_ref:   (1, H)       attn2 bias
    ws_ref:   (H, 1)       score weight as a column
    bs_ref:   (1,)         score bias (SMEM scalar)
    mask_ref: (1, 1, Lp)   1.0 where masked (padding / beyond seq length)
    out_ref:  (1, TR, Lp)  softmax attention weights for this (b, R-tile)
    e1t_ref:  (H, Lp) f32  scratch: attn1(enc_b)^T, resident across the R axis
    """
    # e1^T = W1 @ enc_b^T + b1 — computed once per batch row (R is the inner,
    # "arbitrary" grid axis) and cached for all R tiles of this batch row.
    @pl.when(pl.program_id(1) == 0)
    def _():
        e1t_ref[...] = (
            jnp.dot(w1_ref[...], enc_ref[0], preferred_element_type=jnp.float32)
            + b1_ref[...])                                            # (H, Lp)

    # Formula-side projection for this R tile (tiny MXU matmul).
    f1 = (jnp.dot(frm_ref[...], w2t_ref[...], preferred_element_type=jnp.float32)
          + b2_ref[...])                                              # (TR, H)

    # Additive-attention features with H on sublanes and L on lanes, so the
    # H-contraction below is a sublane reduce and L stays lane-dense through
    # the softmax and the store (no relayout).
    feat = jnp.tanh(e1t_ref[...][None, :, :] + f1[:, :, None])        # (TR, H, Lp)

    # score = Linear(H -> 1): VPU multiply + sublane (H) reduction.
    energy = jnp.sum(feat * ws_ref[...][None, :, :], axis=1) + bs_ref[0]  # (TR, Lp)

    # masked_fill_(seq_mask, -1e12); padded L lanes are masked as well.
    energy = jnp.where(mask_ref[0] > 0.5, -1e12, energy)              # (TR, Lp)

    # Numerically stable softmax over the (lane-dense) seq-len axis.
    m = jnp.max(energy, axis=-1, keepdims=True)
    p = jnp.exp(energy - m)
    denom = jnp.sum(p, axis=-1, keepdims=True)
    inv = pl.reciprocal(denom, approx=True)        # EUP slot (nearly free)
    inv = inv * (2.0 - denom * inv)                # one Newton step -> f32 accuracy
    out_ref[0] = p * inv                           # lane-dense (TR, Lp) store


def formula_attn(formula_score, encoder_outputs, seq_mask, params, *, tr=None):
    """Pallas implementation of FormulaAttn.forward.

    formula_score:   (R, input_size) f32
    encoder_outputs: (L, B, hidden_size) f32
    seq_mask:        (B, L) bool (True = masked) or None
    returns:         (B, R, L) f32 attention weights
    """
    W1, b1, W2, b2, Ws, bs = params
    L, B, H = encoder_outputs.shape
    R, I = formula_score.shape

    # Pad seq-len up to a lane-dense multiple of 128; padded positions are
    # masked so they contribute exactly 0 to the softmax denominator.
    Lp = _round_up(L, 128)

    # R tile: multiple of 8 (sublane-aligned output blocks), sized so the
    # (TR, H, Lp) f32 tanh slab stays ~<= 8 MiB (fits v7x's 64-MiB VMEM along
    # with double-buffered inputs and headroom).
    if tr is None:
        budget_rows = (8 * 1024 * 1024) // (4 * H * Lp)
        tr = max(8, min(_round_up(R, 8), (budget_rows // 8) * 8))
    tr = _round_up(max(int(tr), 1), 8)
    Rp = _round_up(R, tr)
    nr = Rp // tr

    # Layout plumbing: one fused pad+transpose pass over enc (needed anyway
    # for the L padding).  See module-level TODO(synk) about folding it into
    # the encoder producer at production sizes.
    enc = jnp.pad(encoder_outputs.astype(jnp.float32),
                  ((0, Lp - L), (0, 0), (0, 0)))                      # (Lp, B, H)
    enc_t = jnp.transpose(enc, (1, 2, 0))                             # (B, H, Lp)
    frm = jnp.pad(formula_score.astype(jnp.float32), ((0, Rp - R), (0, 0)))

    if seq_mask is None:
        real = jnp.zeros((B, L), jnp.float32)
    else:
        real = seq_mask.astype(jnp.float32)
    mask = jnp.ones((B, Lp), jnp.float32).at[:, :L].set(real)
    mask = mask.reshape(B, 1, Lp)

    w1 = W1.astype(jnp.float32)                                       # (H, H)
    b1c = b1.reshape(H, 1).astype(jnp.float32)
    w2t = W2.T.astype(jnp.float32)                                    # (I, H)
    b2r = b2.reshape(1, H).astype(jnp.float32)
    wsc = Ws.reshape(H, 1).astype(jnp.float32)
    bsr = bs.reshape(1).astype(jnp.float32)

    out_padded = pl.pallas_call(
        formula_attn_kernel,
        out_shape=jax.ShapeDtypeStruct((B, Rp, Lp), jnp.float32),
        # R innermost: enc block / e1^T scratch are reused across all R tiles
        # of a batch row; weights have constant index_maps and stay resident.
        grid=(B, nr),
        in_specs=[
            pl.BlockSpec((1, H, Lp), lambda bi, ri: (bi, 0, 0)),      # enc_t
            pl.BlockSpec((tr, I),    lambda bi, ri: (ri, 0)),         # formula tile
            pl.BlockSpec((H, H),     lambda bi, ri: (0, 0)),          # W1
            pl.BlockSpec((H, 1),     lambda bi, ri: (0, 0)),          # b1
            pl.BlockSpec((I, H),     lambda bi, ri: (0, 0)),          # W2^T
            pl.BlockSpec((1, H),     lambda bi, ri: (0, 0)),          # b2
            pl.BlockSpec((H, 1),     lambda bi, ri: (0, 0)),          # Ws
            pl.BlockSpec(memory_space=pltpu.MemorySpace.SMEM),        # bs (scalar)
            pl.BlockSpec((1, 1, Lp), lambda bi, ri: (bi, 0, 0)),      # mask
        ],
        out_specs=pl.BlockSpec((1, tr, Lp), lambda bi, ri: (bi, ri, 0)),
        scratch_shapes=[pltpu.VMEM((H, Lp), jnp.float32)],
        compiler_params=pltpu.CompilerParams(
            # batch rows are independent -> megacore-shardable on v7x;
            # the R axis carries the e1^T scratch -> sequential.
            dimension_semantics=("parallel", "arbitrary"),
            # above v5e's 16-MiB scoped default, well inside v7x's 64 MiB.
            vmem_limit_bytes=32 * 1024 * 1024),
    )(enc_t, frm, w1, b1c, w2t, b2r, wsc, bsr, mask)

    return out_padded[:, :R, :L]


def formula_attn_ref(formula_score, encoder_outputs, seq_mask, params):
    """Pure-JAX reference mirroring the PyTorch forward exactly."""
    W1, b1, W2, b2, Ws, bs = params
    L, B, H = encoder_outputs.shape
    R = formula_score.shape[0]
    enc = encoder_outputs.reshape(-1, H)                              # (L*B, H)
    e1 = enc @ W1.T + b1                                              # (L*B, H)
    f1 = formula_score @ W2.T + b2                                    # (R, H)
    feat = jnp.tanh(e1[None, :, :] + f1[:, None, :])                  # (R, L*B, H)
    att = (feat @ Ws.T + bs)[..., 0]                                  # (R, L*B)
    att = att.reshape(R, L, B).transpose(2, 0, 1)                     # (B, R, L)
    if seq_mask is not None:
        att = jnp.where(seq_mask[:, None, :], -1e12, att)
    return jax.nn.softmax(att, axis=-1)


if __name__ == "__main__":
    hidden_size = 32
    input_size = hidden_size            # Prediction builds FormulaAttn(hidden, hidden)
    L, B, R = 8, 2, 12                  # max_len, batch, r_num

    key = jax.random.PRNGKey(0)
    keys = jax.random.split(key, 8)

    # Deterministic synthetic parameters (PyTorch Linear shapes: (out, in)).
    W1 = jax.random.normal(keys[0], (hidden_size, hidden_size), jnp.float32) * 0.1
    b1 = jax.random.normal(keys[1], (hidden_size,), jnp.float32) * 0.1
    W2 = jax.random.normal(keys[2], (hidden_size, input_size), jnp.float32) * 0.1
    b2 = jax.random.normal(keys[3], (hidden_size,), jnp.float32) * 0.1
    Ws = jax.random.normal(keys[4], (1, hidden_size), jnp.float32) * 0.1
    bs = jax.random.normal(keys[5], (1,), jnp.float32) * 0.1
    params = (W1, b1, W2, b2, Ws, bs)

    formula_score = jax.random.normal(keys[6], (R, input_size), jnp.float32)
    encoder_outputs = jax.random.normal(keys[7], (L, B, hidden_size), jnp.float32)
    lengths = jnp.array([L, L - 3])
    seq_mask = jnp.arange(L)[None, :] >= lengths[:, None]             # (B, L) True = pad

    # tr=8 -> R padded to 16, grid = (B, 2) = 4 pipelined steps at toy shapes.
    @jax.jit
    def run(fs, eo, sm):
        return formula_attn(fs, eo, sm, params, tr=8)

    out = run(formula_score, encoder_outputs, seq_mask)
    jax.block_until_ready(out)

    ref = formula_attn_ref(formula_score, encoder_outputs, seq_mask, params)
    assert out.shape == (B, R, L)
    assert jnp.allclose(out, ref, atol=1e-5, rtol=1e-5), "mismatch vs reference"

    print("KERNEL_OK")
</pallas_src>

<mosaic_0001>
module attributes {stable_mosaic.version = 11 : i64} {
  func.func @formula_attn_kernel(%arg0: i32, %arg1: i32, %arg2: memref<1x32x128xf32, #tpu.memory_space<vmem>>, %arg3: memref<8x32xf32, #tpu.memory_space<vmem>>, %arg4: memref<32x32xf32, #tpu.memory_space<vmem>>, %arg5: memref<32x1xf32, #tpu.memory_space<vmem>>, %arg6: memref<32x32xf32, #tpu.memory_space<vmem>>, %arg7: memref<1x32xf32, #tpu.memory_space<vmem>>, %arg8: memref<32x1xf32, #tpu.memory_space<vmem>>, %arg9: memref<1xf32, #tpu.memory_space<smem>>, %arg10: memref<1x1x128xf32, #tpu.memory_space<vmem>>, %arg11: memref<1x8x128xf32, #tpu.memory_space<vmem>>, %arg12: memref<32x128xf32, #tpu.memory_space<vmem>>) attributes {dimension_semantics = [#tpu.dimension_semantics<parallel>, #tpu.dimension_semantics<arbitrary>], iteration_bounds = array<i64: 2, 2>, scalar_prefetch = 0 : i64, scratch_operands = 1 : i64, tpu.core_type = #tpu.core_type<tc>, window_params = [{transform_indices = @transform_0, window_bounds = array<i64: 1, 32, 128>}, {transform_indices = @transform_1, window_bounds = array<i64: 8, 32>}, {pipeline_mode = #tpu.pipeline_mode<synchronous>, transform_indices = @transform_2, window_bounds = array<i64: 32, 32>}, {pipeline_mode = #tpu.pipeline_mode<synchronous>, transform_indices = @transform_3, window_bounds = array<i64: 32, 1>}, {pipeline_mode = #tpu.pipeline_mode<synchronous>, transform_indices = @transform_4, window_bounds = array<i64: 32, 32>}, {pipeline_mode = #tpu.pipeline_mode<synchronous>, transform_indices = @transform_5, window_bounds = array<i64: 1, 32>}, {pipeline_mode = #tpu.pipeline_mode<synchronous>, transform_indices = @transform_6, window_bounds = array<i64: 32, 1>}, {transform_indices = @transform_7, window_bounds = array<i64: 1>}, {transform_indices = @transform_8, window_bounds = array<i64: 1, 1, 128>}, {transform_indices = @transform_9, window_bounds = array<i64: 1, 8, 128>}]} {
    %c0_i32 = arith.constant 0 : i32
    %0 = arith.cmpi eq, %arg1, %c0_i32 : i32
    %1 = arith.extui %0 : i1 to i32
    %c0_i32_0 = arith.constant 0 : i32
    %2 = arith.cmpi ne, %1, %c0_i32_0 : i32
    scf.if %2 {
      %c0_23 = arith.constant 0 : index
      %c0_24 = arith.constant 0 : index
      %49 = vector.load %arg4[%c0_23, %c0_24] : memref<32x32xf32, #tpu.memory_space<vmem>>, vector<32x32xf32>
      %c0_25 = arith.constant 0 : index
      %c0_26 = arith.constant 0 : index
      %c0_27 = arith.constant 0 : index
      %50 = vector.load %arg2[%c0_25, %c0_26, %c0_27] : memref<1x32x128xf32, #tpu.memory_space<vmem>>, vector<1x32x128xf32>
      %51 = vector.shape_cast %50 : vector<1x32x128xf32> to vector<32x128xf32>
      %cst_28 = arith.constant dense<0.000000e+00> : vector<32x128xf32>
      %52 = tpu.matmul %49, %51, %cst_28 {dimension_numbers = #tpu.dot_dimension_numbers<[1], [0], [0], [1], [0, 0, 1, 1], [], []>} : vector<32x32xf32>, vector<32x128xf32>, vector<32x128xf32> -> vector<32x128xf32>
      %c0_29 = arith.constant 0 : index
      %c0_30 = arith.constant 0 : index
      %53 = vector.load %arg5[%c0_29, %c0_30] : memref<32x1xf32, #tpu.memory_space<vmem>>, vector<32x1xf32>
      %54 = vector.broadcast %53 : vector<32x1xf32> to vector<32x128xf32>
      %55 = arith.addf %52, %54 : vector<32x128xf32>
      %c0_31 = arith.constant 0 : index
      %c0_32 = arith.constant 0 : index
      %56 = vector.load %arg12[%c0_31, %c0_32] : memref<32x128xf32, #tpu.memory_space<vmem>>, vector<32x128xf32>
      tpu.vector_store %arg12[%c0_31, %c0_32], %55 {strides = array<i32>} : memref<32x128xf32, #tpu.memory_space<vmem>>, vector<32x128xf32>,
    } else {
    }
    %c0 = arith.constant 0 : index
    %c0_1 = arith.constant 0 : index
    %3 = vector.load %arg3[%c0, %c0_1] : memref<8x32xf32, #tpu.memory_space<vmem>>, vector<8x32xf32>
    %c0_2 = arith.constant 0 : index
    %c0_3 = arith.constant 0 : index
    %4 = vector.load %arg6[%c0_2, %c0_3] : memref<32x32xf32, #tpu.memory_space<vmem>>, vector<32x32xf32>
    %cst = arith.constant dense<0.000000e+00> : vector<8x32xf32>
    %5 = tpu.matmul %3, %4, %cst {dimension_numbers = #tpu.dot_dimension_numbers<[1], [0], [0], [1], [0, 0, 1, 1], [], []>} : vector<8x32xf32>, vector<32x32xf32>, vector<8x32xf32> -> vector<8x32xf32>
    %c0_4 = arith.constant 0 : index
    %c0_5 = arith.constant 0 : index
    %6 = vector.load %arg7[%c0_4, %c0_5] : memref<1x32xf32, #tpu.memory_space<vmem>>, vector<1x32xf32>
    %7 = vector.broadcast %6 : vector<1x32xf32> to vector<8x32xf32>
    %8 = arith.addf %5, %7 : vector<8x32xf32>
    %c0_6 = arith.constant 0 : index
    %c0_7 = arith.constant 0 : index
    %9 = vector.load %arg12[%c0_6, %c0_7] : memref<32x128xf32, #tpu.memory_space<vmem>>, vector<32x128xf32>
    %10 = vector.shape_cast %9 : vector<32x128xf32> to vector<1x32x128xf32>
    %11 = vector.shape_cast %8 : vector<8x32xf32> to vector<8x32x1xf32>
    %12 = vector.broadcast %10 : vector<1x32x128xf32> to vector<8x32x128xf32>
    %13 = vector.broadcast %11 : vector<8x32x1xf32> to vector<8x32x128xf32>
    %14 = arith.addf %12, %13 : vector<8x32x128xf32>
    %15 = math.tanh %14 : vector<8x32x128xf32>
    %c0_8 = arith.constant 0 : index
    %c0_9 = arith.constant 0 : index
    %16 = vector.load %arg8[%c0_8, %c0_9] : memref<32x1xf32, #tpu.memory_space<vmem>>, vector<32x1xf32>
    %17 = vector.shape_cast %16 : vector<32x1xf32> to vector<1x32x1xf32>
    %18 = vector.broadcast %17 : vector<1x32x1xf32> to vector<8x32x128xf32>
    %19 = arith.mulf %15, %18 : vector<8x32x128xf32>
    %cst_10 = arith.constant dense<0.000000e+00> : vector<8x128xf32>
    %20 = vector.multi_reduction <add>, %19, %cst_10 [1] : vector<8x32x128xf32> to vector<8x128xf32>
    %c0_11 = arith.constant 0 : index
    %21 = memref.load %arg9[%c0_11] : memref<1xf32, #tpu.memory_space<smem>>
    %22 = vector.broadcast %21 : f32 to vector<8x128xf32>
    %23 = arith.addf %20, %22 : vector<8x128xf32>
    %c0_12 = arith.constant 0 : index
    %c0_13 = arith.constant 0 : index
    %c0_14 = arith.constant 0 : index
    %24 = vector.load %arg10[%c0_12, %c0_13, %c0_14] : memref<1x1x128xf32, #tpu.memory_space<vmem>>, vector<1x1x128xf32>
    %25 = vector.shape_cast %24 : vector<1x1x128xf32> to vector<1x128xf32>
    %cst_15 = arith.constant 5.000000e-01 : f32
    %26 = vector.broadcast %cst_15 : f32 to vector<1x128xf32>
    %27 = arith.cmpf ogt, %25, %26 : vector<1x128xf32>
    %cst_16 = arith.constant -9.99999995E+11 : f32
    %28 = vector.shape_cast %27 : vector<1x128xi1> to vector<1x128xi1>
    %29 = vector.broadcast %28 : vector<1x128xi1> to vector<8x128xi1>
    %30 = vector.broadcast %cst_16 : f32 to vector<8x128xf32>
    %31 = arith.select %29, %30, %23 : vector<8x128xi1>, vector<8x128xf32>
    %cst_17 = arith.constant dense<0xFF800000> : vector<8xf32>
    %32 = vector.multi_reduction <maximumf>, %31, %cst_17 [1] : vector<8x128xf32> to vector<8xf32>
    %33 = vector.shape_cast %32 : vector<8xf32> to vector<8x1xf32>
    %34 = vector.broadcast %33 : vector<8x1xf32> to vector<8x128xf32>
    %35 = arith.subf %31, %34 : vector<8x128xf32>
    %36 = math.exp %35 : vector<8x128xf32>
    %cst_18 = arith.constant dense<0.000000e+00> : vector<8xf32>
    %37 = vector.multi_reduction <add>, %36, %cst_18 [1] : vector<8x128xf32> to vector<8xf32>
    %38 = vector.shape_cast %37 : vector<8xf32> to vector<8x1xf32>
    %39 = tpu.reciprocal %38 {approx = true} : vector<8x1xf32> -> vector<8x1xf32>
    %40 = arith.mulf %38, %39 : vector<8x1xf32>
    %cst_19 = arith.constant 2.000000e+00 : f32
    %41 = vector.broadcast %cst_19 : f32 to vector<8x1xf32>
    %42 = arith.subf %41, %40 : vector<8x1xf32>
    %43 = arith.mulf %39, %42 : vector<8x1xf32>
    %44 = vector.broadcast %43 : vector<8x1xf32> to vector<8x128xf32>
    %45 = arith.mulf %36, %44 : vector<8x128xf32>
    %c0_20 = arith.constant 0 : index
    %c0_21 = arith.constant 0 : index
    %c0_22 = arith.constant 0 : index
    %46 = vector.load %arg11[%c0_20, %c0_21, %c0_22] : memref<1x8x128xf32, #tpu.memory_space<vmem>>, vector<1x8x128xf32>
    %47 = vector.shape_cast %46 : vector<1x8x128xf32> to vector<8x128xf32>
    %48 = vector.shape_cast %45 : vector<8x128xf32> to vector<1x8x128xf32>
    tpu.vector_store %arg11[%c0_20, %c0_21, %c0_22], %48 {strides = array<i32>} : memref<1x8x128xf32, #tpu.memory_space<vmem>>, vector<1x8x128xf32>,
    return
  }
  func.func @transform_0(%arg0: i32, %arg1: i32) -> (i32, i32, i32) {
    %c0_i32 = arith.constant 0 : i32
    %c0_i32_0 = arith.constant 0 : i32
    %c0_i32_1 = arith.constant 0 : i32
    return %arg0, %c0_i32, %c0_i32_0 : i32, i32, i32
  }
  func.func @transform_1(%arg0: i32, %arg1: i32) -> (i32, i32) {
    %c0_i32 = arith.constant 0 : i32
    %c0_i32_0 = arith.constant 0 : i32
    return %arg1, %c0_i32 : i32, i32
  }
  func.func @transform_2(%arg0: i32, %arg1: i32) -> (i32, i32) {
    %c0_i32 = arith.constant 0 : i32
    %c0_i32_0 = arith.constant 0 : i32
    %c0_i32_1 = arith.constant 0 : i32
    return %c0_i32, %c0_i32_0 : i32, i32
  }
  func.func @transform_3(%arg0: i32, %arg1: i32) -> (i32, i32) {
    %c0_i32 = arith.constant 0 : i32
    %c0_i32_0 = arith.constant 0 : i32
    %c0_i32_1 = arith.constant 0 : i32
    return %c0_i32, %c0_i32_0 : i32, i32
  }
  func.func @transform_4(%arg0: i32, %arg1: i32) -> (i32, i32) {
    %c0_i32 = arith.constant 0 : i32
    %c0_i32_0 = arith.constant 0 : i32
    %c0_i32_1 = arith.constant 0 : i32
    return %c0_i32, %c0_i32_0 : i32, i32
  }
  func.func @transform_5(%arg0: i32, %arg1: i32) -> (i32, i32) {
    %c0_i32 = arith.constant 0 : i32
    %c0_i32_0 = arith.constant 0 : i32
    %c0_i32_1 = arith.constant 0 : i32
    return %c0_i32, %c0_i32_0 : i32, i32
  }
  func.func @transform_6(%arg0: i32, %arg1: i32) -> (i32, i32) {
    %c0_i32 = arith.constant 0 : i32
    %c0_i32_0 = arith.constant 0 : i32
    %c0_i32_1 = arith.constant 0 : i32
    return %c0_i32, %c0_i32_0 : i32, i32
  }
  func.func @transform_7(%arg0: i32, %arg1: i32) -> i32 {
    %c0_i32 = arith.constant 0 : i32
    %c0_i32_0 = arith.constant 0 : i32
    return %c0_i32 : i32
  }
  func.func @transform_8(%arg0: i32, %arg1: i32) -> (i32, i32, i32) {
    %c0_i32 = arith.constant 0 : i32
    %c0_i32_0 = arith.constant 0 : i32
    %c0_i32_1 = arith.constant 0 : i32
    return %arg0, %c0_i32, %c0_i32_0 : i32, i32, i32
  }
  func.func @transform_9(%arg0: i32, %arg1: i32) -> (i32, i32, i32) {
    %c0_i32 = arith.constant 0 : i32
    %c0_i32_0 = arith.constant 0 : i32
    return %arg0, %arg1, %c0_i32 : i32, i32, i32
  }
}

</mosaic_0001>

<llo_original>
// kernel: run.1
$region0: #{run.1}
  #allocation0 [shape = 'u32[]', space=smem, size = 0x4, offset = 0x4, fixed_abs, tag = 'smem constant byte address 0x4 - core index']
  #allocation1 [shape = 'u32[144,128]{1,0:T(1,128)}', space=vmem, size = 0x12000, scoped, tag = 'internal scratch']
  #allocation2 [shape = 'f32[32,128]{1,0:T(8,128)}', space=vmem, size = 0x4000, scoped, tag = 'scratch operand']
  #allocation3 [shape = 'f32[1]{0:T(128)S(6)}', space=smem, size = 0x200, scoped, tag = 'scoped memory for run.1']
  %s0 = inlined_call_operand.vmem [shape: f32[2,32,128], index: 0, kind: input, shape index: {}]
  %s1 = inlined_call_operand.vmem [shape: f32[16,32], index: 1, kind: input, shape index: {}]
  %s2 = inlined_call_operand.vmem [shape: f32[32,32], index: 2, kind: input, shape index: {}]
  %s3 = inlined_call_operand.vmem [shape: f32[32,1], index: 3, kind: input, shape index: {}]
  %s4 = inlined_call_operand.vmem [shape: f32[32,32], index: 4, kind: input, shape index: {}]
  %s5 = inlined_call_operand.vmem [shape: f32[1,32], index: 5, kind: input, shape index: {}]
  %s6 = inlined_call_operand.vmem [shape: f32[32,1], index: 6, kind: input, shape index: {}]
  %s7 = inlined_call_operand.<no memory space> [shape: f32[1], index: 7, kind: input, shape index: {}]
  %s8 = inlined_call_operand.vmem [shape: f32[2,1,128], index: 8, kind: input, shape index: {}]
  %s9 = inlined_call_operand.vmem [shape: f32[2,16,128], index: 9, kind: output, shape index: {}]
  %s10 = sld [smem:[#allocation0]]
  $region73: #{run.1} parent=0
    _
  %s12 = ssub.s32 1, %s10
  %s13 = scalar_select 0, %s12, %s10
  %14 = sst [smem:[#allocation3]] %s7
  loop: start=0, step=1, limit=6
  $region2: #{run.1} parent=0 // loop_pre_header
    _
  $region3: #{run.1} parent=0 // loop_header
    %s16 = sphi 0, %s20
    %p17 = scmp.ge.s32.totalorder %s16, 6
    %s23 = sphi 0, %s35
    %s24 = sphi 0, %s31
    %s25 = sphi 0, %s23
    %s26 = sphi 0, %s24
    %s27 = sphi 0, %s25
    %s28 = sphi 0, %s26
    %s38 = sphi 0, %s40
    %s41 = sphi 0, %s38
    %s42 = sphi 0, %s41
    %s58 = sphi 0, %s42
    %s64 = sphi 0, %s66
    %s67 = sphi 0, %s64
    %s68 = sphi 0, %s67
    %s84 = sphi 0, %s68
    %s88 = sphi 0, %s88
    %s90 = sphi 0, %s88
    %s91 = sphi 0, %s90
    %s105 = sphi 0, %s91
    %s109 = sphi 0, %s109
    %s111 = sphi 0, %s109
    %s112 = sphi 0, %s111
    %s126 = sphi 0, %s112
    %s130 = sphi 0, %s130
    %s132 = sphi 0, %s130
    %s133 = sphi 0, %s132
    %s147 = sphi 0, %s133
    %s151 = sphi 0, %s151
    %s153 = sphi 0, %s151
    %s154 = sphi 0, %s153
    %s168 = sphi 0, %s154
    %s172 = sphi 0, %s172
    %s174 = sphi 0, %s172
    %s175 = sphi 0, %s174
    %s189 = sphi 0, %s175
    %s193 = sphi 0, %s193
    %s195 = sphi 0, %s193
    %s196 = sphi 0, %s195
    %s210 = sphi 0, %s196
    %s216 = sphi 0, %s218
    %s219 = sphi 0, %s216
    %s220 = sphi 0, %s219
    %s236 = sphi 0, %s220
    %s244 = sphi 0, %s246
    %s247 = sphi 0, %s244
    %s248 = sphi 0, %s247
    %s264 = sphi 0, %s248
  $region4: #{run.1} parent=0 // loop_header_branch
    %19 = sbr.rel (%p17) target = $region8
  $region5: #{run.1} parent=0 // loop_body
    %s21 = ssub.s32 %s16, 1
    %s22 = ssub.s32 %s16, 2
    %s29 = sadd.s32 1, %s24
    %p30 = scmp.ge.s32.totalorder %s29, 2
    %s31 = scalar_select %p30, 0, %s29
    %s32 = sadd.s32 1, %s23
    %s33 = scalar_select %p30, %s32, %s23
    %p34 = scmp.ge.s32.totalorder %s33, 2
    %s35 = scalar_select %p34, 0, %s33
    %s36 = ssub.s32 %s23, %s35
    %p37 = scmp.eq.s32.totalorder %s36, 0
    %s39 = sadd.s32 %s38, 1
    %s40 = scalar_select %p37, %s38, %s39
    %p43 = pneg %p37
    %p44 = scmp.eq.s32.totalorder %s16, 3
    %p45 = por %p43, %p44
    %p46 = scmp.ne.s32.totalorder %s38, %s41
    %p47 = scmp.eq.s32.totalorder %s16, 0
    %p48 = por %p46, %p47
    %p49 = scmp.ne.s32.totalorder %s38, %s41
    %p50 = scmp.eq.s32.totalorder %s21, 3
    %p51 = por %p49, %p50
    %p52 = scmp.ne.s32.totalorder %s41, %s42
    %p53 = scmp.eq.s32.totalorder %s21, 0
    %p54 = por %p52, %p53
    %p55 = scmp.ne.s32.totalorder %s41, %s42
    %p56 = scmp.eq.s32.totalorder %s22, 3
    %p57 = por %p55, %p56
    %p59 = scmp.ne.s32.totalorder %s42, %s58
    %p60 = scmp.eq.s32.totalorder %s22, 0
    %p61 = por %p59, %p60
    %s62 = ssub.s32 %s24, %s31
    %p63 = scmp.eq.s32.totalorder %s62, 0
    %s65 = sadd.s32 %s64, 1
    %s66 = scalar_select %p63, %s64, %s65
    %p69 = pneg %p63
    %p70 = scmp.eq.s32.totalorder %s16, 3
    %p71 = por %p69, %p70
    %p72 = scmp.ne.s32.totalorder %s64, %s67
    %p73 = scmp.eq.s32.totalorder %s16, 0
    %p74 = por %p72, %p73
    %p75 = scmp.ne.s32.totalorder %s64, %s67
    %p76 = scmp.eq.s32.totalorder %s21, 3
    %p77 = por %p75, %p76
    %p78 = scmp.ne.s32.totalorder %s67, %s68
    %p79 = scmp.eq.s32.totalorder %s21, 0
    %p80 = por %p78, %p79
    %p81 = scmp.ne.s32.totalorder %s67, %s68
    %p82 = scmp.eq.s32.totalorder %s22, 3
    %p83 = por %p81, %p82
    %p85 = scmp.ne.s32.totalorder %s68, %s84
    %p86 = scmp.eq.s32.totalorder %s22, 0
    %p87 = por %p85, %p86
    %s89 = sadd.s32 %s88, 1
    %p92 = scmp.eq.s32.totalorder %s16, 3
    %p93 = scmp.ne.s32.totalorder %s88, %s90
    %p94 = scmp.eq.s32.totalorder %s16, 0
    %p95 = por %p93, %p94
    %p96 = scmp.ne.s32.totalorder %s88, %s90
    %p97 = scmp.eq.s32.totalorder %s21, 3
    %p98 = por %p96, %p97
    %p99 = scmp.ne.s32.totalorder %s90, %s91
    %p100 = scmp.eq.s32.totalorder %s21, 0
    %p101 = por %p99, %p100
    %p102 = scmp.ne.s32.totalorder %s90, %s91
    %p103 = scmp.eq.s32.totalorder %s22, 3
    %p104 = por %p102, %p103
    %p106 = scmp.ne.s32.totalorder %s91, %s105
    %p107 = scmp.eq.s32.totalorder %s22, 0
    %p108 = por %p106, %p107
    %s110 = sadd.s32 %s109, 1
    %p113 = scmp.eq.s32.totalorder %s16, 3
    %p114 = scmp.ne.s32.totalorder %s109, %s111
    %p115 = scmp.eq.s32.totalorder %s16, 0
    %p116 = por %p114, %p115
    %p117 = scmp.ne.s32.totalorder %s109, %s111
    %p118 = scmp.eq.s32.totalorder %s21, 3
    %p119 = por %p117, %p118
    %p120 = scmp.ne.s32.totalorder %s111, %s112
    %p121 = scmp.eq.s32.totalorder %s21, 0
    %p122 = por %p120, %p121
    %p123 = scmp.ne.s32.totalorder %s111, %s112
    %p124 = scmp.eq.s32.totalorder %s22, 3
    %p125 = por %p123, %p124
    %p127 = scmp.ne.s32.totalorder %s112, %s126
    %p128 = scmp.eq.s32.totalorder %s22, 0
    %p129 = por %p127, %p128
    %s131 = sadd.s32 %s130, 1
    %p134 = scmp.eq.s32.totalorder %s16, 3
    %p135 = scmp.ne.s32.totalorder %s130, %s132
    %p136 = scmp.eq.s32.totalorder %s16, 0
    %p137 = por %p135, %p136
    %p138 = scmp.ne.s32.totalorder %s130, %s132
    %p139 = scmp.eq.s32.totalorder %s21, 3
    %p140 = por %p138, %p139
    %p141 = scmp.ne.s32.totalorder %s132, %s133
    %p142 = scmp.eq.s32.totalorder %s21, 0
    %p143 = por %p141, %p142
    %p144 = scmp.ne.s32.totalorder %s132, %s133
    %p145 = scmp.eq.s32.totalorder %s22, 3
    %p146 = por %p144, %p145
    %p148 = scmp.ne.s32.totalorder %s133, %s147
    %p149 = scmp.eq.s32.totalorder %s22, 0
    %p150 = por %p148, %p149
    %s152 = sadd.s32 %s151, 1
    %p155 = scmp.eq.s32.totalorder %s16, 3
    %p156 = scmp.ne.s32.totalorder %s151, %s153
    %p157 = scmp.eq.s32.totalorder %s16, 0
    %p158 = por %p156, %p157
    %p159 = scmp.ne.s32.totalorder %s151, %s153
    %p160 = scmp.eq.s32.totalorder %s21, 3
    %p161 = por %p159, %p160
    %p162 = scmp.ne.s32.totalorder %s153, %s154
    %p163 = scmp.eq.s32.totalorder %s21, 0
    %p164 = por %p162, %p163
    %p165 = scmp.ne.s32.totalorder %s153, %s154
    %p166 = scmp.eq.s32.totalorder %s22, 3
    %p167 = por %p165, %p166
    %p169 = scmp.ne.s32.totalorder %s154, %s168
    %p170 = scmp.eq.s32.totalorder %s22, 0
    %p171 = por %p169, %p170
    %s173 = sadd.s32 %s172, 1
    %p176 = scmp.eq.s32.totalorder %s16, 3
    %p177 = scmp.ne.s32.totalorder %s172, %s174
    %p178 = scmp.eq.s32.totalorder %s16, 0
    %p179 = por %p177, %p178
    %p180 = scmp.ne.s32.totalorder %s172, %s174
    %p181 = scmp.eq.s32.totalorder %s21, 3
    %p182 = por %p180, %p181
    %p183 = scmp.ne.s32.totalorder %s174, %s175
    %p184 = scmp.eq.s32.totalorder %s21, 0
    %p185 = por %p183, %p184
    %p186 = scmp.ne.s32.totalorder %s174, %s175
    %p187 = scmp.eq.s32.totalorder %s22, 3
    %p188 = por %p186, %p187
    %p190 = scmp.ne.s32.totalorder %s175, %s189
    %p191 = scmp.eq.s32.totalorder %s22, 0
    %p192 = por %p190, %p191
    %s194 = sadd.s32 %s193, 1
    %p197 = scmp.eq.s32.totalorder %s16, 3
    %p198 = scmp.ne.s32.totalorder %s193, %s195
    %p199 = scmp.eq.s32.totalorder %s16, 0
    %p200 = por %p198, %p199
    %p201 = scmp.ne.s32.totalorder %s193, %s195
    %p202 = scmp.eq.s32.totalorder %s21, 3
    %p203 = por %p201, %p202
    %p204 = scmp.ne.s32.totalorder %s195, %s196
    %p205 = scmp.eq.s32.totalorder %s21, 0
    %p206 = por %p204, %p205
    %p207 = scmp.ne.s32.totalorder %s195, %s196
    %p208 = scmp.eq.s32.totalorder %s22, 3
    %p209 = por %p207, %p208
    %p211 = scmp.ne.s32.totalorder %s196, %s210
    %p212 = scmp.eq.s32.totalorder %s22, 0
    %p213 = por %p211, %p212
    %s214 = ssub.s32 %s23, %s35
    %p215 = scmp.eq.s32.totalorder %s214, 0
    %s217 = sadd.s32 %s216, 1
    %s218 = scalar_select %p215, %s216, %s217
    %p221 = pneg %p215
    %p222 = scmp.eq.s32.totalorder %s16, 3
    %p223 = por %p221, %p222
    %p224 = scmp.ne.s32.totalorder %s216, %s219
    %p225 = scmp.eq.s32.totalorder %s16, 0
    %p226 = por %p224, %p225
    %p227 = scmp.ne.s32.totalorder %s216, %s219
    %p228 = scmp.eq.s32.totalorder %s21, 3
    %p229 = por %p227, %p228
    %p230 = scmp.ne.s32.totalorder %s219, %s220
    %p231 = scmp.eq.s32.totalorder %s21, 0
    %p232 = por %p230, %p231
    %p233 = scmp.ne.s32.totalorder %s219, %s220
    %p234 = scmp.eq.s32.totalorder %s22, 3
    %p235 = por %p233, %p234
    %p237 = scmp.ne.s32.totalorder %s220, %s236
    %p238 = scmp.eq.s32.totalorder %s22, 0
    %p239 = por %p237, %p238
    %s240 = ssub.s32 %s23, %s35
    %s241 = ssub.s32 %s24, %s31
    %s242 = sor.u32 %s240, %s241
    %p243 = scmp.eq.s32.totalorder %s242, 0
    %s245 = sadd.s32 %s244, 1
    %s246 = scalar_select %p243, %s244, %s245
    %p249 = pneg %p243
    %p250 = scmp.eq.s32.totalorder %s16, 3
    %p251 = por %p249, %p250
    %p252 = scmp.ne.s32.totalorder %s244, %s247
    %p253 = scmp.eq.s32.totalorder %s16, 0
    %p254 = por %p252, %p253
    %p255 = scmp.ne.s32.totalorder %s244, %s247
    %p256 = scmp.eq.s32.totalorder %s21, 3
    %p257 = por %p255, %p256
    %p258 = scmp.ne.s32.totalorder %s247, %s248
    %p259 = scmp.eq.s32.totalorder %s21, 0
    %p260 = por %p258, %p259
    %p261 = scmp.ne.s32.totalorder %s247, %s248
    %p262 = scmp.eq.s32.totalorder %s22, 3
    %p263 = por %p261, %p262
    %p265 = scmp.ne.s32.totalorder %s248, %s264
    %p266 = scmp.eq.s32.totalorder %s22, 0
    %p267 = por %p265, %p266
    %p268 = scmp.le.s32.totalorder 1, %s16
    %p269 = scmp.lt.s32.totalorder %s16, 5
    %p270 = pnand %p268, %p269
    %p271 = pneg %p270
    // Predicated region
    $region9: #{run.1} parent=5 // pred_check
      _
    $region10: #{run.1} parent=5 // pred_check_branch
      %273 = sbr.rel (%p270) target = $region12
    $region11: #{run.1} parent=5 // pred_region
      %s274 = ssub.s32 %s16, 1
      // Predicated region
      $region13: #{run.1} parent=11 // pred_check
        %p275 = pneg %p101
      $region14: #{run.1} parent=11 // pred_check_branch
        %277 = sbr.rel (%p275) target = $region16
      $region15: #{run.1} parent=11 // pred_region
        _
      $region16: #{run.1} parent=11 // pred_fallthru
        _
      // Predicated region
      $region17: #{run.1} parent=11 // pred_check
        %p278 = pneg %p122
      $region18: #{run.1} parent=11 // pred_check_branch
        %280 = sbr.rel (%p278) target = $region20
      $region19: #{run.1} parent=11 // pred_region
        _
      $region20: #{run.1} parent=11 // pred_fallthru
        _
      // Predicated region
      $region21: #{run.1} parent=11 // pred_check
        %p281 = pneg %p143
      $region22: #{run.1} parent=11 // pred_check_branch
        %283 = sbr.rel (%p281) target = $region24
      $region23: #{run.1} parent=11 // pred_region
        _
      $region24: #{run.1} parent=11 // pred_fallthru
        _
      // Predicated region
      $region25: #{run.1} parent=11 // pred_check
        %p284 = pneg %p164
      $region26: #{run.1} parent=11 // pred_check_branch
        %286 = sbr.rel (%p284) target = $region28
      $region27: #{run.1} parent=11 // pred_region
        _
      $region28: #{run.1} parent=11 // pred_fallthru
        _
      // Predicated region
      $region29: #{run.1} parent=11 // pred_check
        %p287 = pneg %p185
      $region30: #{run.1} parent=11 // pred_check_branch
        %289 = sbr.rel (%p287) target = $region32
      $region31: #{run.1} parent=11 // pred_region
        _
      $region32: #{run.1} parent=11 // pred_fallthru
        _
      // Predicated region
      $region33: #{run.1} parent=11 // pred_check
        %p290 = pneg %p206
      $region34: #{run.1} parent=11 // pred_check_branch
        %292 = sbr.rel (%p290) target = $region36
      $region35: #{run.1} parent=11 // pred_region
        _
      $region36: #{run.1} parent=11 // pred_fallthru
        _
    $region12: #{run.1} parent=5 // pred_fallthru
      _
    %p293 = scmp.lt.s32.totalorder %s16, 4
    // Predicated region
    $region37: #{run.1} parent=5 // pred_check
      %p294 = pneg %p293
    $region38: #{run.1} parent=5 // pred_check_branch
      %296 = sbr.rel (%p294) target = $region40
    $region39: #{run.1} parent=5 // pred_region
      // Predicated region
      $region41: #{run.1} parent=39 // pred_check
        %p297 = pneg %p48
      $region42: #{run.1} parent=39 // pred_check_branch
        %299 = sbr.rel (%p297) target = $region44
      $region43: #{run.1} parent=39 // pred_region
        %p300 = scmp.lt.s32.totalorder %s23, 1
        %s301 = scalar_select %p300, %s23, 1
        %s302 = smul.addr %s301, 4
        %s303 = smul.addr %s302, 8
        %s304 = scalar_lea.vmem %s0, %s303
      $region44: #{run.1} parent=39 // pred_fallthru
        _
      // Predicated region
      $region45: #{run.1} parent=39 // pred_check
        %p305 = pneg %p74
      $region46: #{run.1} parent=39 // pred_check_branch
        %307 = sbr.rel (%p305) target = $region48
      $region47: #{run.1} parent=39 // pred_region
        %p308 = scmp.lt.s32.totalorder %s24, 1
        %s309 = scalar_select %p308, %s24, 1
        %s310 = smul.addr %s309, 8
        %s311 = scalar_lea.vmem %s1, %s310
      $region48: #{run.1} parent=39 // pred_fallthru
        _
      // Predicated region
      $region49: #{run.1} parent=39 // pred_check
        %p312 = pneg %p226
      $region50: #{run.1} parent=39 // pred_check_branch
        %314 = sbr.rel (%p312) target = $region52
      $region51: #{run.1} parent=39 // pred_region
        %p315 = scmp.lt.s32.totalorder %s23, 1
        %s316 = scalar_select %p315, %s23, 1
        %s317 = scalar_lea.vmem %s8, %s316
      $region52: #{run.1} parent=39 // pred_fallthru
        _
    $region40: #{run.1} parent=5 // pred_fallthru
      _
    %p318 = scmp.le.s32.totalorder 1, %s16
    %p319 = scmp.lt.s32.totalorder %s16, 5
    %p320 = pnand %p318, %p319
    %p321 = pneg %p320
    // Predicated region
    $region53: #{run.1} parent=5 // pred_check
      _
    $region54: #{run.1} parent=5 // pred_check_branch
      %323 = sbr.rel (%p320) target = $region56
    $region55: #{run.1} parent=5 // pred_region
      %s324 = ssub.s32 %s16, 1
      %p325 = scmp.lt.s32.totalorder %s25, 1
      %s326 = scalar_select %p325, %s25, 1
      %s327 = smul.addr %s326, 4
      %s328 = smul.addr %s327, 8
      %s329 = scalar_lea.vmem %s0, %s328
      %p330 = pneg %p54
      %p331 = pneg %p51
      %p332 = scmp.lt.s32.totalorder %s26, 1
      %s333 = scalar_select %p332, %s26, 1
      %s334 = smul.addr %s333, 8
      %s335 = scalar_lea.vmem %s1, %s334
      %p336 = pneg %p80
      %p337 = pneg %p77
      %p338 = pneg %p101
      %p339 = pneg %p98
      %p340 = pneg %p122
      %p341 = pneg %p119
      %p342 = pneg %p143
      %p343 = pneg %p140
      %p344 = pneg %p164
      %p345 = pneg %p161
      %p346 = pneg %p185
      %p347 = pneg %p182
      %p348 = pneg %p206
      %p349 = pneg %p203
      %p350 = scmp.lt.s32.totalorder %s25, 1
      %s351 = scalar_select %p350, %s25, 1
      %s352 = scalar_lea.vmem %s8, %s351
      %p353 = pneg %p232
      %p354 = pneg %p229
      %p355 = pneg %p260
      %p356 = pneg %p257
      %p357 = scmp.lt.s32.totalorder %s25, 1
      %s358 = scalar_select %p357, %s25, 1
      %p359 = scmp.lt.s32.totalorder %s26, 1
      %s360 = scalar_select %p359, %s26, 1
      %s361 = smul.addr %s358, 2
      %s362 = sadd.s32 %s360, %s361
      %s363 = smul.addr %s362, 8
      %s364 = scalar_lea.vmem %s9, %s363
      %p365 = scmp.lt.s32.totalorder %s25, 1
      %s366 = scalar_select %p365, %s25, 1
      %s367 = smul.addr %s366, 4
      %s368 = smul.addr %s367, 8
      %s369 = scalar_lea.vmem %s0, %s368
      %p370 = scmp.lt.s32.totalorder %s26, 1
      %s371 = scalar_select %p370, %s26, 1
      %s372 = smul.addr %s371, 8
      %s373 = scalar_lea.vmem %s1, %s372
      %p374 = scmp.lt.s32.totalorder %s25, 1
      %s375 = scalar_select %p374, %s25, 1
      %s376 = scalar_lea.vmem %s8, %s375
      %p377 = scmp.lt.s32.totalorder %s25, 1
      %s378 = scalar_select %p377, %s25, 1
      %p379 = scmp.lt.s32.totalorder %s26, 1
      %s380 = scalar_select %p379, %s26, 1
      %s381 = smul.addr %s378, 2
      %s382 = sadd.s32 %s380, %s381
      %s383 = smul.addr %s382, 8
      %s384 = scalar_lea.vmem %s9, %s383
      %p385 = scmp.eq.s32.totalorder %s26, 0
      // Predicated region
      $region57: #{run.1} parent=55 // pred_check
        %p386 = pneg %p385
      $region58: #{run.1} parent=55 // pred_check_branch
        %388 = sbr.rel (%p386) target = $region60
      $region59: #{run.1} parent=55 // pred_region
        %v389 = vld [vmem:[%s2] sm:$0xff]
        %v390 = vld [vmem:[%s2 + $0x8] sm:$0xff]
        %v391 = vld [vmem:[%s2 + $0x10] sm:$0xff]
        %v392 = vld [vmem:[%s2 + $0x18] sm:$0xff]
        %v393 = vld [vmem:[%s369] sm:$0xff]
        %v394 = vld [vmem:[%s369 + $0x8] sm:$0xff]
        %v395 = vld [vmem:[%s369 + $0x10] sm:$0xff]
        %v396 = vld [vmem:[%s369 + $0x18] sm:$0xff]
        %v397 = vld [vmem:[%s3] sm:$0xff]
        %v398 = vld [vmem:[%s3 + $0x8] sm:$0xff]
        %v399 = vld [vmem:[%s3 + $0x10] sm:$0xff]
        %v400 = vld [vmem:[%s3 + $0x18] sm:$0xff]
        %402 = vset.pattern.permute.xlu0 0
        %403 = vperm.xlu0 %402, %v397
        %v404 = vpop.permute.xlu0 %403
        %407 = vset.pattern.permute.xlu0 0
        %408 = vperm.xlu0 %407, %v398
        %v409 = vpop.permute.xlu0 %408
        %412 = vset.pattern.permute.xlu0 0
        %413 = vperm.xlu0 %412, %v399
        %v414 = vpop.permute.xlu0 %413
        %417 = vset.pattern.permute.xlu0 0
        %418 = vperm.xlu0 %417, %v400
        %v419 = vpop.permute.xlu0 %418
        %vm421 = vcmask 261120
        %v423 = vsel %vm421, %v389, 0
        %v426 = vsel %vm421, %v390, 0
        %v429 = vsel %vm421, %v391, 0
        %v432 = vsel %vm421, %v392, 0
        %434 = vmatprep.subr.mxu0 0.0
        %435 = vmatpush1.msra.mxu0 0.0
        %436 = vmatprep.subr.mxu0 0.0
        %437 = vmatpush1.msra.mxu0 0.0
        %438 = vmatprep.subr.mxu0 0.0
        %439 = vmatpush1.msra.mxu0 0.0
        %440 = vmatprep.subr.mxu0 0.0
        %441 = vmatpush1.msra.mxu0 0.0
        %442 = vmatprep.subr.mxu0 0.0
        %443 = vmatpush1.msra.mxu0 0.0
        %444 = vmatprep.subr.mxu0 0.0
        %445 = vmatpush1.msra.mxu0 0.0
        %446 = vmatprep.subr.mxu0 0.0
        %447 = vmatpush1.msra.mxu0 0.0
        %448 = vmatprep.subr.mxu0 0.0
        %449 = vmatpush1.msra.mxu0 0.0
        %450 = vmatprep.subr.mxu0 0.0
        %451 = vmatpush1.msra.mxu0 0.0
        %452 = vmatprep.subr.mxu0 0.0
        %453 = vmatpush1.msra.mxu0 0.0
        %454 = vmatprep.subr.mxu0 0.0
        %455 = vmatpush1.msra.mxu0 0.0
        %456 = vmatprep.subr.mxu0 0.0
        %457 = vmatpush1.msra.mxu0 0.0
        %458 = vmatprep.subr.mxu0 0.0
        %459 = vmatpush1.msra.mxu0 %v396
        %460 = vmatprep.subr.mxu0 0.0
        %461 = vmatpush1.msra.mxu0 %v395
        %462 = vmatprep.subr.mxu0 0.0
        %463 = vmatpush1.msra.mxu0 %v394
        %464 = vmatprep.subr.mxu0 0.0
        %465 = vmatpush1.msra.mxu0 %v393
        %466 = vmatprep.subr.mxu0 0.0
        %467 = vmatpush2.msra.mxu0 0.0
        %468 = vmatprep.subr.mxu0 0.0
        %469 = vmatpush2.msra.mxu0 0.0
        %470 = vmatprep.subr.mxu0 0.0
        %471 = vmatpush2.msra.mxu0 0.0
        %472 = vmatprep.subr.mxu0 0.0
        %473 = vmatpush2.msra.mxu0 0.0
        %474 = vmatprep.subr.mxu0 0.0
        %475 = vmatpush2.msra.mxu0 0.0
        %476 = vmatprep.subr.mxu0 0.0
        %477 = vmatpush2.msra.mxu0 0.0
        %478 = vmatprep.subr.mxu0 0.0
        %479 = vmatpush2.msra.mxu0 0.0
        %480 = vmatprep.subr.mxu0 0.0
        %481 = vmatpush2.msra.mxu0 0.0
        %482 = vmatprep.subr.mxu0 0.0
        %483 = vmatpush2.msra.mxu0 0.0
        %484 = vmatprep.subr.mxu0 0.0
        %485 = vmatpush2.msra.mxu0 0.0
        %486 = vmatprep.subr.mxu0 0.0
        %487 = vmatpush2.msra.mxu0 0.0
        %488 = vmatprep.subr.mxu0 0.0
        %489 = vmatpush2.msra.mxu0 0.0
        %490 = vmatprep.subr.mxu0 0.0
        %491 = vmatpush2.msra.mxu0 0.0
        %492 = vmatprep.subr.mxu0 0.0
        %493 = vmatpush2.msra.mxu0 0.0
        %494 = vmatprep.subr.mxu0 0.0
        %495 = vmatpush2.msra.mxu0 0.0
        %496 = vmatprep.subr.mxu0 0.0
        %497 = vmatpush2.msra.mxu0 0.0
        %498 = vmatprep.mubr.f32.mxu0 0.0
        %499 = vmatmul.mubr.f32.gmra.mxu0 %v423
        %v500 = vpop.f32.mrf.mxu0
        %v501 = vadd.f32 %v404, %v500
        %v502 = vpop.f32.mrf.mxu0
        %503 = vmatprep.mubr.f32.mxu0 0.0
        %504 = vmatmul.mubr.f32.gmra.mxu0 %v426
        %v505 = vpop.f32.mrf.mxu0
        %v506 = vadd.f32 %v409, %v505
        %v507 = vpop.f32.mrf.mxu0
        %508 = vmatprep.mubr.f32.mxu0 0.0
        %509 = vmatmul.mubr.f32.gmra.mxu0 %v429
        %v510 = vpop.f32.mrf.mxu0
        %v511 = vadd.f32 %v414, %v510
        %v512 = vpop.f32.mrf.mxu0
        %513 = vmatprep.mubr.f32.mxu0 0.0
        %514 = vmatmul.mubr.f32.gmra.mxu0 %v432
        %v515 = vpop.f32.mrf.mxu0
        %v516 = vadd.f32 %v419, %v515
        %v517 = vpop.f32.mrf.mxu0
        %518 = vdwg.mxu0
        %519 = vst [vmem:[#allocation2] sm:$0xff] %v501
        %520 = vst [vmem:[#allocation2 + $0x8] sm:$0xff] %v506
        %521 = vst [vmem:[#allocation2 + $0x10] sm:$0xff] %v511
        %522 = vst [vmem:[#allocation2 + $0x18] sm:$0xff] %v516
      $region60: #{run.1} parent=55 // pred_fallthru
        _
      %v523 = vld [vmem:[%s373] sm:$0xff]
      %v524 = vld [vmem:[%s4] sm:$0xff]
      %v525 = vld [vmem:[%s4 + $0x8] sm:$0xff]
      %v526 = vld [vmem:[%s4 + $0x10] sm:$0xff]
      %v527 = vld [vmem:[%s4 + $0x18] sm:$0xff]
      %v528 = vld [vmem:[%s5] sm:$0x1]
      %v530 = vlaneseq
      %v531 = vshrl.u32 %v530, 7
      %v532 = vsub.s32 0, %v531
      %v533 = vrot.slane %v528, %v532
      %vm535 = vcmask 261120
      %v537 = vsel %vm535, %v523, 0
      %539 = vmatprep.subr.mxu0 0.0
      %540 = vmatpush1.msra.mxu0 0.0
      %541 = vmatprep.subr.mxu0 0.0
      %542 = vmatpush1.msra.mxu0 0.0
      %543 = vmatprep.subr.mxu0 0.0
      %544 = vmatpush1.msra.mxu0 0.0
      %545 = vmatprep.subr.mxu0 0.0
      %546 = vmatpush1.msra.mxu0 0.0
      %547 = vmatprep.subr.mxu0 0.0
      %548 = vmatpush1.msra.mxu0 0.0
      %549 = vmatprep.subr.mxu0 0.0
      %550 = vmatpush1.msra.mxu0 0.0
      %551 = vmatprep.subr.mxu0 0.0
      %552 = vmatpush1.msra.mxu0 0.0
      %553 = vmatprep.subr.mxu0 0.0
      %554 = vmatpush1.msra.mxu0 0.0
      %555 = vmatprep.subr.mxu0 0.0
      %556 = vmatpush1.msra.mxu0 0.0
      %557 = vmatprep.subr.mxu0 0.0
      %558 = vmatpush1.msra.mxu0 0.0
      %559 = vmatprep.subr.mxu0 0.0
      %560 = vmatpush1.msra.mxu0 0.0
      %561 = vmatprep.subr.mxu0 0.0
      %562 = vmatpush1.msra.mxu0 0.0
      %563 = vmatprep.subr.mxu0 0.0
      %564 = vmatpush1.msra.mxu0 %v527
      %565 = vmatprep.subr.mxu0 0.0
      %566 = vmatpush1.msra.mxu0 %v526
      %567 = vmatprep.subr.mxu0 0.0
      %568 = vmatpush1.msra.mxu0 %v525
      %569 = vmatprep.subr.mxu0 0.0
      %570 = vmatpush1.msra.mxu0 %v524
      %571 = vmatprep.subr.mxu0 0.0
      %572 = vmatpush2.msra.mxu0 0.0
      %573 = vmatprep.subr.mxu0 0.0
      %574 = vmatpush2.msra.mxu0 0.0
      %575 = vmatprep.subr.mxu0 0.0
      %576 = vmatpush2.msra.mxu0 0.0
      %577 = vmatprep.subr.mxu0 0.0
      %578 = vmatpush2.msra.mxu0 0.0
      %579 = vmatprep.subr.mxu0 0.0
      %580 = vmatpush2.msra.mxu0 0.0
      %581 = vmatprep.subr.mxu0 0.0
      %582 = vmatpush2.msra.mxu0 0.0
      %583 = vmatprep.subr.mxu0 0.0
      %584 = vmatpush2.msra.mxu0 0.0
      %585 = vmatprep.subr.mxu0 0.0
      %586 = vmatpush2.msra.mxu0 0.0
      %587 = vmatprep.subr.mxu0 0.0
      %588 = vmatpush2.msra.mxu0 0.0
      %589 = vmatprep.subr.mxu0 0.0
      %590 = vmatpush2.msra.mxu0 0.0
      %591 = vmatprep.subr.mxu0 0.0
      %592 = vmatpush2.msra.mxu0 0.0
      %593 = vmatprep.subr.mxu0 0.0
      %594 = vmatpush2.msra.mxu0 0.0
      %595 = vmatprep.subr.mxu0 0.0
      %596 = vmatpush2.msra.mxu0 0.0
      %597 = vmatprep.subr.mxu0 0.0
      %598 = vmatpush2.msra.mxu0 0.0
      %599 = vmatprep.subr.mxu0 0.0
      %600 = vmatpush2.msra.mxu0 0.0
      %601 = vmatprep.subr.mxu0 0.0
      %602 = vmatpush2.msra.mxu0 0.0
      %603 = vmatprep.mubr.f32.mxu0 0.0
      %604 = vmatmul.mubr.f32.gmra.mxu0 %v537
      %v605 = vpop.f32.mrf.mxu0
      %v606 = vadd.f32 %v533, %v605
      %v607 = vpop.f32.mrf.mxu0
      %608 = vdwg.mxu0
      %v609 = vld [vmem:[#allocation2] sm:$0xff]
      %v610 = vld [vmem:[#allocation2 + $0x8] sm:$0xff]
      %v611 = vld [vmem:[#allocation2 + $0x10] sm:$0xff]
      %v612 = vld [vmem:[#allocation2 + $0x18] sm:$0xff]
      %v613 = vlaneseq
      %v614 = vshrl.u32 %v613, 7
      %v615 = vsub.s32 0, %v614
      %v616 = vrot.slane %v606, %v615
      %618 = vbcast.lane.b32.xlu0 %v616, 256
      %v619 = vpop.permute.xlu0 %618
      %s621 = sor.u32 256, 8
      %622 = vbcast.lane.b32.xlu0 %v616, %s621
      %v623 = vpop.permute.xlu0 %622
      %s625 = sor.u32 256, 16
      %626 = vbcast.lane.b32.xlu0 %v616, %s625
      %v627 = vpop.permute.xlu0 %626
      %s629 = sor.u32 256, 24
      %630 = vbcast.lane.b32.xlu0 %v616, %s629
      %v631 = vpop.permute.xlu0 %630
      %v632 = vlaneseq
      %v633 = vshrl.u32 %v632, 7
      %v634 = vsub.s32 1, %v633
      %v635 = vrot.slane %v606, %v634
      %637 = vbcast.lane.b32.xlu0 %v635, 256
      %v638 = vpop.permute.xlu0 %637
      %s640 = sor.u32 256, 8
      %641 = vbcast.lane.b32.xlu0 %v635, %s640
      %v642 = vpop.permute.xlu0 %641
      %s644 = sor.u32 256, 16
      %645 = vbcast.lane.b32.xlu0 %v635, %s644
      %v646 = vpop.permute.xlu0 %645
      %s648 = sor.u32 256, 24
      %649 = vbcast.lane.b32.xlu0 %v635, %s648
      %v650 = vpop.permute.xlu0 %649
      %v651 = vlaneseq
      %v652 = vshrl.u32 %v651, 7
      %v653 = vsub.s32 2, %v652
      %v654 = vrot.slane %v606, %v653
      %656 = vbcast.lane.b32.xlu0 %v654, 256
      %v657 = vpop.permute.xlu0 %656
      %s659 = sor.u32 256, 8
      %660 = vbcast.lane.b32.xlu0 %v654, %s659
      %v661 = vpop.permute.xlu0 %660
      %s663 = sor.u32 256, 16
      %664 = vbcast.lane.b32.xlu0 %v654, %s663
      %v665 = vpop.permute.xlu0 %664
      %s667 = sor.u32 256, 24
      %668 = vbcast.lane.b32.xlu0 %v654, %s667
      %v669 = vpop.permute.xlu0 %668
      %v670 = vlaneseq
      %v671 = vshrl.u32 %v670, 7
      %v672 = vsub.s32 3, %v671
      %v673 = vrot.slane %v606, %v672
      %675 = vbcast.lane.b32.xlu0 %v673, 256
      %v676 = vpop.permute.xlu0 %675
      %s678 = sor.u32 256, 8
      %679 = vbcast.lane.b32.xlu0 %v673, %s678
      %v680 = vpop.permute.xlu0 %679
      %s682 = sor.u32 256, 16
      %683 = vbcast.lane.b32.xlu0 %v673, %s682
      %v684 = vpop.permute.xlu0 %683
      %s686 = sor.u32 256, 24
      %687 = vbcast.lane.b32.xlu0 %v673, %s686
      %v688 = vpop.permute.xlu0 %687
      %v689 = vlaneseq
      %v690 = vshrl.u32 %v689, 7
      %v691 = vsub.s32 4, %v690
      %v692 = vrot.slane %v606, %v691
      %694 = vbcast.lane.b32.xlu0 %v692, 256
      %v695 = vpop.permute.xlu0 %694
      %s697 = sor.u32 256, 8
      %698 = vbcast.lane.b32.xlu0 %v692, %s697
      %v699 = vpop.permute.xlu0 %698
      %s701 = sor.u32 256, 16
      %702 = vbcast.lane.b32.xlu0 %v692, %s701
      %v703 = vpop.permute.xlu0 %702
      %s705 = sor.u32 256, 24
      %706 = vbcast.lane.b32.xlu0 %v692, %s705
      %v707 = vpop.permute.xlu0 %706
      %v708 = vlaneseq
      %v709 = vshrl.u32 %v708, 7
      %v710 = vsub.s32 5, %v709
      %v711 = vrot.slane %v606, %v710
      %713 = vbcast.lane.b32.xlu0 %v711, 256
      %v714 = vpop.permute.xlu0 %713
      %s716 = sor.u32 256, 8
      %717 = vbcast.lane.b32.xlu0 %v711, %s716
      %v718 = vpop.permute.xlu0 %717
      %s720 = sor.u32 256, 16
      %721 = vbcast.lane.b32.xlu0 %v711, %s720
      %v722 = vpop.permute.xlu0 %721
      %s724 = sor.u32 256, 24
      %725 = vbcast.lane.b32.xlu0 %v711, %s724
      %v726 = vpop.permute.xlu0 %725
      %v727 = vlaneseq
      %v728 = vshrl.u32 %v727, 7
      %v729 = vsub.s32 6, %v728
      %v730 = vrot.slane %v606, %v729
      %732 = vbcast.lane.b32.xlu0 %v730, 256
      %v733 = vpop.permute.xlu0 %732
      %s735 = sor.u32 256, 8
      %736 = vbcast.lane.b32.xlu0 %v730, %s735
      %v737 = vpop.permute.xlu0 %736
      %s739 = sor.u32 256, 16
      %740 = vbcast.lane.b32.xlu0 %v730, %s739
      %v741 = vpop.permute.xlu0 %740
      %s743 = sor.u32 256, 24
      %744 = vbcast.lane.b32.xlu0 %v730, %s743
      %v745 = vpop.permute.xlu0 %744
      %v746 = vlaneseq
      %v747 = vshrl.u32 %v746, 7
      %v748 = vsub.s32 7, %v747
      %v749 = vrot.slane %v606, %v748
      %751 = vbcast.lane.b32.xlu0 %v749, 256
      %v752 = vpop.permute.xlu0 %751
      %s754 = sor.u32 256, 8
      %755 = vbcast.lane.b32.xlu0 %v749, %s754
      %v756 = vpop.permute.xlu0 %755
      %s758 = sor.u32 256, 16
      %759 = vbcast.lane.b32.xlu0 %v749, %s758
      %v760 = vpop.permute.xlu0 %759
      %s762 = sor.u32 256, 24
      %763 = vbcast.lane.b32.xlu0 %v749, %s762
      %v764 = vpop.permute.xlu0 %763
      %v765 = vadd.f32 %v609, %v619
      %v766 = vadd.f32 %v610, %v623
      %v767 = vadd.f32 %v611, %v627
      %v768 = vadd.f32 %v612, %v631
      %v769 = vadd.f32 %v609, %v638
      %v770 = vadd.f32 %v610, %v642
      %v771 = vadd.f32 %v611, %v646
      %v772 = vadd.f32 %v612, %v650
      %v773 = vadd.f32 %v609, %v657
      %v774 = vadd.f32 %v610, %v661
      %v775 = vadd.f32 %v611, %v665
      %v776 = vadd.f32 %v612, %v669
      %v777 = vadd.f32 %v609, %v676
      %v778 = vadd.f32 %v610, %v680
      %v779 = vadd.f32 %v611, %v684
      %v780 = vadd.f32 %v612, %v688
      %v781 = vadd.f32 %v609, %v695
      %v782 = vadd.f32 %v610, %v699
      %v783 = vadd.f32 %v611, %v703
      %v784 = vadd.f32 %v612, %v707
      %v785 = vadd.f32 %v609, %v714
      %v786 = vadd.f32 %v610, %v718
      %v787 = vadd.f32 %v611, %v722
      %v788 = vadd.f32 %v612, %v726
      %v789 = vadd.f32 %v609, %v733
      %v790 = vadd.f32 %v610, %v737
      %v791 = vadd.f32 %v611, %v741
      %v792 = vadd.f32 %v612, %v745
      %v793 = vadd.f32 %v609, %v752
      %v794 = vadd.f32 %v610, %v756
      %v795 = vadd.f32 %v611, %v760
      %v796 = vadd.f32 %v612, %v764
      %v797 = vtanh.pop %v765
      %v798 = vtanh.pop %v766
      %v799 = vtanh.pop %v767
      %v800 = vtanh.pop %v768
      %v801 = vtanh.pop %v769
      %v802 = vtanh.pop %v770
      %v803 = vtanh.pop %v771
      %v804 = vtanh.pop %v772
      %v805 = vtanh.pop %v773
      %v806 = vtanh.pop %v774
      %v807 = vtanh.pop %v775
      %v808 = vtanh.pop %v776
      %v809 = vtanh.pop %v777
      %v810 = vtanh.pop %v778
      %v811 = vtanh.pop %v779
      %v812 = vtanh.pop %v780
      %v813 = vtanh.pop %v781
      %v814 = vtanh.pop %v782
      %v815 = vtanh.pop %v783
      %v816 = vtanh.pop %v784
      %v817 = vtanh.pop %v785
      %v818 = vtanh.pop %v786
      %v819 = vtanh.pop %v787
      %v820 = vtanh.pop %v788
      %v821 = vtanh.pop %v789
      %v822 = vtanh.pop %v790
      %v823 = vtanh.pop %v791
      %v824 = vtanh.pop %v792
      %v825 = vtanh.pop %v793
      %v826 = vtanh.pop %v794
      %v827 = vtanh.pop %v795
      %v828 = vtanh.pop %v796
      %v829 = vld [vmem:[%s6] sm:$0xff]
      %v830 = vld [vmem:[%s6 + $0x8] sm:$0xff]
      %v831 = vld [vmem:[%s6 + $0x10] sm:$0xff]
      %v832 = vld [vmem:[%s6 + $0x18] sm:$0xff]
      %834 = vset.pattern.permute.xlu0 0
      %835 = vperm.xlu0 %834, %v829
      %v836 = vpop.permute.xlu0 %835
      %839 = vset.pattern.permute.xlu0 0
      %840 = vperm.xlu0 %839, %v830
      %v841 = vpop.permute.xlu0 %840
      %844 = vset.pattern.permute.xlu0 0
      %845 = vperm.xlu0 %844, %v831
      %v846 = vpop.permute.xlu0 %845
      %849 = vset.pattern.permute.xlu0 0
      %850 = vperm.xlu0 %849, %v832
      %v851 = vpop.permute.xlu0 %850
      %v853 = vmul.f32 %v797, %v836
      %v854 = vmul.f32 %v798, %v841
      %v855 = vmul.f32 %v799, %v846
      %v856 = vmul.f32 %v800, %v851
      %v857 = vmul.f32 %v801, %v836
      %v858 = vmul.f32 %v802, %v841
      %v859 = vmul.f32 %v803, %v846
      %v860 = vmul.f32 %v804, %v851
      %v861 = vmul.f32 %v805, %v836
      %v862 = vmul.f32 %v806, %v841
      %v863 = vmul.f32 %v807, %v846
      %v864 = vmul.f32 %v808, %v851
      %v865 = vmul.f32 %v809, %v836
      %v866 = vmul.f32 %v810, %v841
      %v867 = vmul.f32 %v811, %v846
      %v868 = vmul.f32 %v812, %v851
      %v869 = vmul.f32 %v813, %v836
      %v870 = vmul.f32 %v814, %v841
      %v871 = vmul.f32 %v815, %v846
      %v872 = vmul.f32 %v816, %v851
      %v873 = vmul.f32 %v817, %v836
      %v874 = vmul.f32 %v818, %v841
      %v875 = vmul.f32 %v819, %v846
      %v876 = vmul.f32 %v820, %v851
      %v877 = vmul.f32 %v821, %v836
      %v878 = vmul.f32 %v822, %v841
      %v879 = vmul.f32 %v823, %v846
      %v880 = vmul.f32 %v824, %v851
      %v881 = vmul.f32 %v825, %v836
      %v882 = vmul.f32 %v826, %v841
      %v883 = vmul.f32 %v827, %v846
      %v884 = vmul.f32 %v828, %v851
      %v885 = vadd.f32 %v853, %v854
      %v886 = vadd.f32 %v885, %v855
      %v887 = vadd.f32 %v886, %v856
      %v888 = vrot.slane %v887, 4
      %v889 = vadd.f32 %v887, %v888
      %v890 = vrot.slane %v889, 2
      %v891 = vadd.f32 %v889, %v890
      %v892 = vrot.slane %v891, 1
      %v893 = vadd.f32 %v891, %v892
      %v894 = vadd.f32 %v857, %v858
      %v895 = vadd.f32 %v894, %v859
      %v896 = vadd.f32 %v895, %v860
      %v897 = vrot.slane %v896, 4
      %v898 = vadd.f32 %v896, %v897
      %v899 = vrot.slane %v898, 2
      %v900 = vadd.f32 %v898, %v899
      %v901 = vrot.slane %v900, 1
      %v902 = vadd.f32 %v900, %v901
      %v903 = vadd.f32 %v861, %v862
      %v904 = vadd.f32 %v903, %v863
      %v905 = vadd.f32 %v904, %v864
      %v906 = vrot.slane %v905, 4
      %v907 = vadd.f32 %v905, %v906
      %v908 = vrot.slane %v907, 2
      %v909 = vadd.f32 %v907, %v908
      %v910 = vrot.slane %v909, 1
      %v911 = vadd.f32 %v909, %v910
      %v912 = vadd.f32 %v865, %v866
      %v913 = vadd.f32 %v912, %v867
      %v914 = vadd.f32 %v913, %v868
      %v915 = vrot.slane %v914, 4
      %v916 = vadd.f32 %v914, %v915
      %v917 = vrot.slane %v916, 2
      %v918 = vadd.f32 %v916, %v917
      %v919 = vrot.slane %v918, 1
      %v920 = vadd.f32 %v918, %v919
      %v921 = vadd.f32 %v869, %v870
      %v922 = vadd.f32 %v921, %v871
      %v923 = vadd.f32 %v922, %v872
      %v924 = vrot.slane %v923, 4
      %v925 = vadd.f32 %v923, %v924
      %v926 = vrot.slane %v925, 2
      %v927 = vadd.f32 %v925, %v926
      %v928 = vrot.slane %v927, 1
      %v929 = vadd.f32 %v927, %v928
      %v930 = vadd.f32 %v873, %v874
      %v931 = vadd.f32 %v930, %v875
      %v932 = vadd.f32 %v931, %v876
      %v933 = vrot.slane %v932, 4
      %v934 = vadd.f32 %v932, %v933
      %v935 = vrot.slane %v934, 2
      %v936 = vadd.f32 %v934, %v935
      %v937 = vrot.slane %v936, 1
      %v938 = vadd.f32 %v936, %v937
      %v939 = vadd.f32 %v877, %v878
      %v940 = vadd.f32 %v939, %v879
      %v941 = vadd.f32 %v940, %v880
      %v942 = vrot.slane %v941, 4
      %v943 = vadd.f32 %v941, %v942
      %v944 = vrot.slane %v943, 2
      %v945 = vadd.f32 %v943, %v944
      %v946 = vrot.slane %v945, 1
      %v947 = vadd.f32 %v945, %v946
      %v948 = vadd.f32 %v881, %v882
      %v949 = vadd.f32 %v948, %v883
      %v950 = vadd.f32 %v949, %v884
      %v951 = vrot.slane %v950, 4
      %v952 = vadd.f32 %v950, %v951
      %v953 = vrot.slane %v952, 2
      %v954 = vadd.f32 %v952, %v953
      %v955 = vrot.slane %v954, 1
      %v956 = vadd.f32 %v954, %v955
      %s957 = sld [smem:[#allocation3]]
      %v958 = vstv %s957
      %v959 = vadd.f32 %v893, %v958
      %v960 = vadd.f32 %v902, %v958
      %v961 = vadd.f32 %v911, %v958
      %v962 = vadd.f32 %v920, %v958
      %v963 = vadd.f32 %v929, %v958
      %v964 = vadd.f32 %v938, %v958
      %v965 = vadd.f32 %v947, %v958
      %v966 = vadd.f32 %v956, %v958
      %v967 = vld [vmem:[%s376] sm:$0x1]
      %vm968 = vcmp.gt.f32.partialorder %v967, 0.5
      %v969 = vsel %vm968, 1, 0
      %v970 = vlaneseq
      %v971 = vshrl.u32 %v970, 7
      %v972 = vsub.s32 0, %v971
      %v973 = vrot.slane %v969, %v972
      %vm974 = vcmp.eq.s32.totalorder %v973, 1
      %vm983 = vcmask 1041409
      %v984 = vsel %vm983, %v960, %v959
      %vm985 = vcmask 1042434
      %v986 = vsel %vm985, %v961, %v984
      %vm987 = vcmask 1043459
      %v988 = vsel %vm987, %v962, %v986
      %vm989 = vcmask 1044484
      %v990 = vsel %vm989, %v963, %v988
      %vm991 = vcmask 1045509
      %v992 = vsel %vm991, %v964, %v990
      %vm993 = vcmask 1046534
      %v994 = vsel %vm993, %v965, %v992
      %vm995 = vcmask 1047559
      %v996 = vsel %vm995, %v966, %v994
      %v998 = vsel %vm974, -1e+12, %v996
      %999 = vmax.xlane.f32.xlu0 %v998
      %v1000 = vpop.xlane.xlu0 %999
      %v1001 = vsub.f32 %v998, %v1000
      %v1002 = vmul.f32 %v1001, 1.442695
      %v1003 = vpow.pop %v1002
      %1004 = vadd.xlane.f32.xlu0 %v1003
      %v1005 = vpop.xlane.xlu0 %1004
      %v1006 = vrcp.pop %v1005
      %v1007 = vmul.f32 %v1005, %v1006
      %v1008 = vsub.f32 2.0, %v1007
      %v1009 = vmul.f32 %v1006, %v1008
      %v1010 = vmul.f32 %v1003, %v1009
      %1011 = vst [vmem:[%s384] sm:$0xff] %v1010
      %p1012 = scmp.lt.s32.totalorder %s25, 1
      %s1013 = scalar_select %p1012, %s25, 1
      %p1014 = scmp.lt.s32.totalorder %s26, 1
      %s1015 = scalar_select %p1014, %s26, 1
      %s1016 = smul.addr %s1013, 2
      %s1017 = sadd.s32 %s1015, %s1016
      %s1018 = smul.addr %s1017, 8
      %s1019 = scalar_lea.vmem %s9, %s1018
      // Predicated region
      $region61: #{run.1} parent=55 // pred_check
        %p1020 = pneg %p257
      $region62: #{run.1} parent=55 // pred_check_branch
        %1022 = sbr.rel (%p1020) target = $region64
      $region63: #{run.1} parent=55 // pred_region
        _
      $region64: #{run.1} parent=55 // pred_fallthru
        _
    $region56: #{run.1} parent=5 // pred_fallthru
      _
    %p1023 = scmp.le.s32.totalorder 2, %s16
    // Predicated region
    $region65: #{run.1} parent=5 // pred_check
      %p1024 = pneg %p1023
    $region66: #{run.1} parent=5 // pred_check_branch
      %1026 = sbr.rel (%p1024) target = $region68
    $region67: #{run.1} parent=5 // pred_region
      %s1027 = ssub.s32 %s16, 2
      // Predicated region
      $region69: #{run.1} parent=67 // pred_check
        %p1028 = pneg %p263
      $region70: #{run.1} parent=67 // pred_check_branch
        %1030 = sbr.rel (%p1028) target = $region72
      $region71: #{run.1} parent=67 // pred_region
        %p1031 = scmp.lt.s32.totalorder %s27, 1
        %s1032 = scalar_select %p1031, %s27, 1
        %p1033 = scmp.lt.s32.totalorder %s28, 1
        %s1034 = scalar_select %p1033, %s28, 1
        %s1035 = smul.addr %s1032, 2
        %s1036 = sadd.s32 %s1034, %s1035
        %s1037 = smul.addr %s1036, 8
        %s1038 = scalar_lea.vmem %s9, %s1037
      $region72: #{run.1} parent=67 // pred_fallthru
        _
    $region68: #{run.1} parent=5 // pred_fallthru
      _
  $region6: #{run.1} parent=0 // loop_footer
    %s20 = sadd.s32 1, %s16
  $region7: #{run.1} parent=0 // loop_footer_branch
    %15 = sbr.rel target = $region3
  $region8: #{run.1} parent=0 // loop_exit
    _

</llo_original>
